<compile_context>
chip_gen: v5e
topology: v5e:2x2
jax: 0.10.0
libtpu: 0.0.40
codegen_flags: <defaults>
</compile_context>

<pallas_src>
import jax
import jax.numpy as jnp
from jax.experimental import pallas as pl
from jax.experimental.pallas import tpu as pltpu

_MIB = 1024 * 1024


def _proj_kernel(w_ref, b_ref, x_ref, o_ref):
    # w_ref: (tE, D_in) compute dtype, b_ref: (tE, 1) f32,
    # x_ref: (D_in, tT) compute dtype, o_ref: (tE, tT) out dtype.
    acc = jnp.dot(w_ref[...], x_ref[...], preferred_element_type=jnp.float32)
    o_ref[...] = (acc + b_ref[...]).astype(o_ref.dtype)


def _tpu_vmem_capacity_bytes(default_bytes=64 * _MIB):
    """Per-core VMEM capacity; conservative (v7x-sized) fallback."""
    try:
        info = pltpu.get_tpu_info()
        cap = getattr(info, "vmem_capacity_bytes", None)
        if cap:
            return int(cap)
    except Exception:
        pass
    return default_bytes


def _footprint_bytes(d_in, t_e, t_t, in_isz, out_isz, bias_isz):
    # Pallas double-buffers EVERY input block, even constant-index ones, so the
    # resident weight/bias are counted twice as well (perf-review fix).
    return (2 * t_e * d_in * in_isz          # weight
            + 2 * t_e * bias_isz             # bias
            + 2 * d_in * t_t * in_isz        # x tile
            + 2 * t_e * t_t * out_isz)       # out tile


def _round_down_128(v):
    return max(128, (v // 128) * 128)


def _pick_tiles(d_in, e, lane_total, n_batch, *, max_tile_t, budget,
                in_isz, out_isz, bias_isz):
    t_e = e
    t_t = lane_total if lane_total <= max_tile_t else max_tile_t

    def fp(te, tt):
        return _footprint_bytes(d_in, te, tt, in_isz, out_isz, bias_isz)

    # 1) shrink the lane tile first (keep the weight resident as long as we can)
    while t_t > 128 and fp(t_e, t_t) > budget:
        t_t = _round_down_128(t_t // 2)
    # 2) if the double-buffered weight still blows the budget, tile E too
    while t_e > 128 and fp(t_e, t_t) > budget:
        t_e = _round_down_128(t_e // 2)
    # 3) megacore / pipelining floor: aim for >= 4 grid steps (v7x has 2 TCs)
    while t_t > 128 and n_batch * pl.cdiv(e, t_e) * pl.cdiv(lane_total, t_t) < 4:
        t_t = _round_down_128(t_t // 2)
    return t_e, t_t


def proj_pallas(x, weight, bias, *, compute_dtype=jnp.bfloat16, out_dtype=None,
                max_tile_t=1024, vmem_budget=24 * _MIB):
    """y[b, :, t] = weight @ x[b, :, t] + bias, produced directly in (B, E, T).

    x: (B, D_in, T), weight: (E, D_in)  [nn.Linear layout], bias: (E,).
    Inputs are cast to `compute_dtype` (bf16) with an f32 MXU accumulator;
    the bias is added in f32 before the final downcast to `out_dtype`.
    """
    B, D_in, T = x.shape
    E = weight.shape[0]
    compute_dtype = jnp.dtype(compute_dtype)
    out_dtype = jnp.dtype(out_dtype) if out_dtype is not None else x.dtype

    # bf16 inputs -> ~2x less HBM traffic; the kernel is bandwidth bound on
    # v5e / v6e / v7x so this is the dominant win.  f32 accumulation keeps
    # numerics close to the PyTorch reference.
    xw = x.astype(compute_dtype)
    ww = weight.astype(compute_dtype)
    bias_col = bias.astype(jnp.float32).reshape(E, 1)

    in_isz = compute_dtype.itemsize
    out_isz = out_dtype.itemsize
    bias_isz = 4

    cap = _tpu_vmem_capacity_bytes()
    budget = min(int(vmem_budget), cap // 2)

    # Short-T guard: fold B into the lane dim so stores are lane-dense
    # (otherwise T < 128 forces masked vst.msk partial stores).
    fold_batch = T < 128
    lane_total = B * T if fold_batch else T
    n_batch = 1 if fold_batch else B

    tE, tT = _pick_tiles(D_in, E, lane_total, n_batch,
                         max_tile_t=max_tile_t, budget=budget,
                         in_isz=in_isz, out_isz=out_isz, bias_isz=bias_isz)

    footprint = _footprint_bytes(D_in, tE, tT, in_isz, out_isz, bias_isz)
    # Explicit, generation-aware scoped-VMEM limit (v5e default is only 16 MiB;
    # v7x physical VMEM is 64 MiB) -- always >= footprint, with headroom.
    vmem_limit = int(min(max(cap - 8 * _MIB, footprint + _MIB),
                         max(footprint + 4 * _MIB, 32 * _MIB)))

    nE = pl.cdiv(E, tE)
    nT = pl.cdiv(lane_total, tT)

    cost = pl.CostEstimate(
        flops=2 * B * T * D_in * E,
        transcendentals=0,
        bytes_accessed=int(xw.size * in_isz + ww.size * in_isz
                           + bias_col.size * bias_isz + B * E * T * out_isz),
    )
    n_grid_axes = 2 if fold_batch else 3
    cparams = pltpu.CompilerParams(
        dimension_semantics=("parallel",) * n_grid_axes,
        vmem_limit_bytes=vmem_limit,
    )

    if fold_batch:
        # x2[d, b*T + t] = x[b, d, t] -> lane dim B*T (one-off layout plumbing
        # outside the kernel; only taken for short sequences).
        x2 = jnp.transpose(xw, (1, 0, 2)).reshape(D_in, B * T)
        out2 = pl.pallas_call(
            _proj_kernel,
            out_shape=jax.ShapeDtypeStruct((E, B * T), out_dtype),
            grid_spec=pltpu.PrefetchScalarGridSpec(
                num_scalar_prefetch=0,
                grid=(nE, nT),
                in_specs=[
                    pl.BlockSpec((tE, D_in), lambda j, t: (j, 0)),
                    pl.BlockSpec((tE, 1), lambda j, t: (j, 0)),
                    pl.BlockSpec((D_in, tT), lambda j, t: (0, t)),
                ],
                out_specs=pl.BlockSpec((tE, tT), lambda j, t: (j, t)),
            ),
            compiler_params=cparams,
            cost_estimate=cost,
        )(ww, bias_col, x2)
        return jnp.transpose(out2.reshape(E, B, T), (1, 0, 2))

    return pl.pallas_call(
        _proj_kernel,
        out_shape=jax.ShapeDtypeStruct((B, E, T), out_dtype),
        grid_spec=pltpu.PrefetchScalarGridSpec(
            num_scalar_prefetch=0,
            grid=(B, nE, nT),
            in_specs=[
                # weight / bias: resident (constant t index); tiled over E only
                # when the double-buffered weight would not fit the budget.
                pl.BlockSpec((tE, D_in), lambda b, j, t: (j, 0)),
                pl.BlockSpec((tE, 1), lambda b, j, t: (j, 0)),
                # x tile in native (B, D_in, T) layout; batch dim squeezed.
                pl.BlockSpec((None, D_in, tT), lambda b, j, t: (b, 0, t)),
            ],
            out_specs=pl.BlockSpec((None, tE, tT), lambda b, j, t: (b, j, t)),
        ),
        compiler_params=cparams,
        cost_estimate=cost,
    )(ww, bias_col, xw)


class SubModelPallas:
    """JAX/Pallas equivalent of SubModel with resnet=None, encoder=None."""

    def __init__(self, input_dim, encoder_embed_dim, key,
                 dtype=jnp.float32, compute_dtype=jnp.bfloat16):
        kw, kb = jax.random.split(key)
        # nn.Linear stores weight as (out, in); bias as (out,).
        bound = 1.0 / float(input_dim) ** 0.5
        self.weight = jax.random.uniform(
            kw, (encoder_embed_dim, input_dim), dtype, -bound, bound)
        self.bias = jax.random.uniform(
            kb, (encoder_embed_dim,), dtype, -bound, bound)
        self.input_dim = input_dim
        self.embed_dim = encoder_embed_dim
        self.compute_dtype = compute_dtype

    def __call__(self, x):
        # x: (B, input_dim, T) -> (B, embed_dim, T)
        B, D_in, T = x.shape
        assert D_in == self.input_dim
        return proj_pallas(x, self.weight, self.bias,
                           compute_dtype=self.compute_dtype)


if __name__ == "__main__":
    B, D_IN, T, E = 2, 32, 16, 32

    key = jax.random.PRNGKey(0)
    k_x, k_params = jax.random.split(key)
    x = jax.random.normal(k_x, (B, D_IN, T), dtype=jnp.float32)

    model = SubModelPallas(input_dim=D_IN, encoder_embed_dim=E, key=k_params)
    out = jax.block_until_ready(model(x))
    assert out.shape == (B, E, T), out.shape

    # Reference 1: same math with identical bf16 input rounding + f32 accumulate.
    xr = x.astype(jnp.bfloat16).astype(jnp.float32)
    wr = model.weight.astype(jnp.bfloat16).astype(jnp.float32)
    ref = jnp.einsum("bdt,ed->bet", xr, wr) + model.bias[None, :, None]
    assert jnp.allclose(out, ref.astype(out.dtype), atol=1e-2, rtol=1e-2), (
        float(jnp.max(jnp.abs(out - ref))))

    # Reference 2: full-f32 PyTorch semantics (difference only from bf16 input
    # rounding; accumulation is f32 on the MXU).
    ref32 = jnp.einsum("bdt,ed->bet", x, model.weight) + model.bias[None, :, None]
    assert jnp.allclose(out, ref32, atol=5e-2, rtol=5e-2)

    print("KERNEL_OK")
</pallas_src>

<mosaic_0001>
module attributes {stable_mosaic.version = 11 : i64} {
  func.func @_proj_kernel(%arg0: i32, %arg1: i32, %arg2: memref<32x32xbf16, #tpu.memory_space<vmem>>, %arg3: memref<32x1xf32, #tpu.memory_space<vmem>>, %arg4: memref<32x32xbf16, #tpu.memory_space<vmem>>, %arg5: memref<32x32xf32, #tpu.memory_space<vmem>>) attributes {dimension_semantics = [#tpu.dimension_semantics<parallel>, #tpu.dimension_semantics<parallel>], iteration_bounds = array<i64: 1, 1>, scalar_prefetch = 0 : i64, scratch_operands = 0 : i64, tpu.core_type = #tpu.core_type<tc>, window_params = [{transform_indices = @transform_0, window_bounds = array<i64: 32, 32>}, {transform_indices = @transform_1, window_bounds = array<i64: 32, 1>}, {transform_indices = @transform_2, window_bounds = array<i64: 32, 32>}, {transform_indices = @transform_3, window_bounds = array<i64: 32, 32>}]} {
    %c0 = arith.constant 0 : index
    %c0_0 = arith.constant 0 : index
    %0 = vector.load %arg2[%c0, %c0_0] : memref<32x32xbf16, #tpu.memory_space<vmem>>, vector<32x32xbf16>
    %c0_1 = arith.constant 0 : index
    %c0_2 = arith.constant 0 : index
    %1 = vector.load %arg4[%c0_1, %c0_2] : memref<32x32xbf16, #tpu.memory_space<vmem>>, vector<32x32xbf16>
    %cst = arith.constant dense<0.000000e+00> : vector<32x32xf32>
    %2 = tpu.matmul %0, %1, %cst {dimension_numbers = #tpu.dot_dimension_numbers<[1], [0], [0], [1], [0, 0, 1, 1], [], []>} : vector<32x32xbf16>, vector<32x32xbf16>, vector<32x32xf32> -> vector<32x32xf32>
    %c0_3 = arith.constant 0 : index
    %c0_4 = arith.constant 0 : index
    %3 = vector.load %arg3[%c0_3, %c0_4] : memref<32x1xf32, #tpu.memory_space<vmem>>, vector<32x1xf32>
    %4 = vector.broadcast %3 : vector<32x1xf32> to vector<32x32xf32>
    %5 = arith.addf %2, %4 : vector<32x32xf32>
    %c0_5 = arith.constant 0 : index
    %c0_6 = arith.constant 0 : index
    %6 = vector.load %arg5[%c0_5, %c0_6] : memref<32x32xf32, #tpu.memory_space<vmem>>, vector<32x32xf32>
    tpu.vector_store %arg5[%c0_5, %c0_6], %5 {strides = array<i32>} : memref<32x32xf32, #tpu.memory_space<vmem>>, vector<32x32xf32>,
    return
  }
  func.func @transform_0(%arg0: i32, %arg1: i32) -> (i32, i32) {
    %c0_i32 = arith.constant 0 : i32
    %c0_i32_0 = arith.constant 0 : i32
    return %arg0, %c0_i32 : i32, i32
  }
  func.func @transform_1(%arg0: i32, %arg1: i32) -> (i32, i32) {
    %c0_i32 = arith.constant 0 : i32
    %c0_i32_0 = arith.constant 0 : i32
    return %arg0, %c0_i32 : i32, i32
  }
  func.func @transform_2(%arg0: i32, %arg1: i32) -> (i32, i32) {
    %c0_i32 = arith.constant 0 : i32
    %c0_i32_0 = arith.constant 0 : i32
    return %c0_i32, %arg1 : i32, i32
  }
  func.func @transform_3(%arg0: i32, %arg1: i32) -> (i32, i32) {
    %c0_i32 = arith.constant 0 : i32
    return %arg0, %arg1 : i32, i32
  }
}

</mosaic_0001>

<llo_original>
// kernel: tpu_custom_call.1
$region0: #{tpu_custom_call.1}
  #allocation0 [shape = 'u32[]', space=smem, size = 0x4, offset = 0x4, fixed_abs, tag = 'smem constant byte address 0x4 - core index']
  #allocation1 [shape = 'u32[72,128]{1,0:T(1,128)}', space=vmem, size = 0x9000, scoped, tag = 'internal scratch']
  %s0 = inlined_call_operand.vmem [shape: bf16[32,32], index: 0, kind: input, shape index: {}]
  %s1 = inlined_call_operand.vmem [shape: f32[32,1], index: 1, kind: input, shape index: {}]
  %s2 = inlined_call_operand.vmem [shape: bf16[32,32], index: 2, kind: input, shape index: {}]
  %s3 = inlined_call_operand.hbm [shape: f32[32,32], index: 3, kind: output, shape index: {}]
  %s4 = sld [smem:[#allocation0]]
  $region22: #{tpu_custom_call.1} parent=0
    _
  %s6 = ssub.s32 1, %s4
  %s7 = scalar_select 0, %s6, %s4
  $region1: #{tpu_custom_call.1} parent=0
    #allocation2 [shape = 'u8[16384]{0}', space=vmem, size = 0x4000, scoped, tag = 'output window, operand 0, single buffered']
    #allocation3 [shape = 's32[1]{0}', space=sflag, size = 0x4, scoped, tag = 'scoped memory for tpu_custom_call.1']
    %8 = vsyncpa [#allocation3], 0
    // Predicated region
    $region2: #{tpu_custom_call.1} parent=1 // pred_check
      _
    $region3: #{tpu_custom_call.1} parent=1 // pred_check_branch
      %10 = sbr.rel (0) target = $region5
    $region4: #{tpu_custom_call.1} parent=1 // pred_region
      _
    $region5: #{tpu_custom_call.1} parent=1 // pred_fallthru
      _
    // Predicated region
    $region6: #{tpu_custom_call.1} parent=1 // pred_check
      _
    $region7: #{tpu_custom_call.1} parent=1 // pred_check_branch
      %12 = sbr.rel (0) target = $region9
    $region8: #{tpu_custom_call.1} parent=1 // pred_region
      _
    $region9: #{tpu_custom_call.1} parent=1 // pred_fallthru
      _
    // Predicated region
    $region10: #{tpu_custom_call.1} parent=1 // pred_check
      _
    $region11: #{tpu_custom_call.1} parent=1 // pred_check_branch
      %14 = sbr.rel (0) target = $region13
    $region12: #{tpu_custom_call.1} parent=1 // pred_region
      _
    $region13: #{tpu_custom_call.1} parent=1 // pred_fallthru
      _
    %v16 = vld [vmem:[%s0] sm:$0xf]
    %v17 = vld [vmem:[%s0 + $0x4] sm:$0xf]
    %v18 = vld [vmem:[%s0 + $0x8] sm:$0xf]
    %v19 = vld [vmem:[%s0 + $0xc] sm:$0xf]
    %v20 = vld [vmem:[%s2] sm:$0xf]
    %v21 = vld [vmem:[%s2 + $0x4] sm:$0xf]
    %v22 = vld [vmem:[%s2 + $0x8] sm:$0xf]
    %v23 = vld [vmem:[%s2 + $0xc] sm:$0xf]
    %v24 = vld [vmem:[%s1] sm:$0xff]
    %v25 = vld [vmem:[%s1 + $0x8] sm:$0xff]
    %v26 = vld [vmem:[%s1 + $0x10] sm:$0xff]
    %v27 = vld [vmem:[%s1 + $0x18] sm:$0xff]
    %29 = vset.pattern.permute.xlu0 0
    %30 = vperm.xlu0 %29, %v24
    %v31 = vpop.permute.xlu0 %30
    %34 = vset.pattern.permute.xlu0 0
    %35 = vperm.xlu0 %34, %v25
    %v36 = vpop.permute.xlu0 %35
    %39 = vset.pattern.permute.xlu0 0
    %40 = vperm.xlu0 %39, %v26
    %v41 = vpop.permute.xlu0 %40
    %44 = vset.pattern.permute.xlu0 0
    %45 = vperm.xlu0 %44, %v27
    %v46 = vpop.permute.xlu0 %45
    %v52 = vunpack.c.l.b16 %v16
    %v53 = vunpack.c.l.b16 %v17
    %v54 = vunpack.c.l.b16 %v18
    %v55 = vunpack.c.l.b16 %v19
    %v56 = vpack.c.b16 %v53, %v52
    %v57 = vpack.c.b16 %v55, %v54
    %v62 = vunpack.c.l.b16 %v20
    %v63 = vunpack.c.l.b16 %v21
    %v64 = vunpack.c.l.b16 %v22
    %v65 = vunpack.c.l.b16 %v23
    %v66 = vpack.c.b16 %v63, %v62
    %v67 = vpack.c.b16 %v65, %v64
    %vm70 = vcmask 261120
    %v72 = vsel %vm70, %v56, 0
    %v75 = vsel %vm70, %v57, 0
    %77 = vmatpush.bf16.msra.mxu0 0
    %78 = vmatpush.bf16.msra.mxu0 0
    %79 = vmatpush.bf16.msra.mxu0 0
    %80 = vmatpush.bf16.msra.mxu0 0
    %81 = vmatpush.bf16.msra.mxu0 0
    %82 = vmatpush.bf16.msra.mxu0 0
    %83 = vmatpush.bf16.msra.mxu0 %v67
    %84 = vmatpush.bf16.msra.mxu0 %v66
    %85 = vmatmul.bf16.gmra.mxu0 %v72
    %v86 = vpop.f32.mrf.mxu0
    %v87 = vadd.f32 %v31, %v86
    %v88 = vpop.f32.mrf.mxu0
    %v89 = vadd.f32 %v36, %v88
    %90 = vmatmul.bf16.gmra.mxu0 %v75
    %v91 = vpop.f32.mrf.mxu0
    %v92 = vadd.f32 %v41, %v91
    %v93 = vpop.f32.mrf.mxu0
    %v94 = vadd.f32 %v46, %v93
    %95 = vdwg.mxu0
    %96 = vst.msk [vmem:[#allocation2] sm:$0xff] %vm70, %v87
    %97 = vst.msk [vmem:[#allocation2 + $0x8] sm:$0xff] %vm70, %v89
    %98 = vst.msk [vmem:[#allocation2 + $0x10] sm:$0xff] %vm70, %v92
    %99 = vst.msk [vmem:[#allocation2 + $0x18] sm:$0xff] %vm70, %v94
    // Predicated region
    $region14: #{tpu_custom_call.1} parent=1 // pred_check
      _
    $region15: #{tpu_custom_call.1} parent=1 // pred_check_branch
      %101 = sbr.rel (0) target = $region17
    $region16: #{tpu_custom_call.1} parent=1 // pred_region
      %103 = vsyncadd [#allocation3], 0
      %s104 = sshll.u32 [#allocation2], 4
      %s105 = int_to_ptr.vmem [resolvable:$true] %s104
      %s106 = sshll.u32 %s3, 4
      %s107 = int_to_ptr.hbm [resolvable:$true] %s106
      %112 = dma.vmem_to_hbm [thread:$0]  %s105, 512, %s107, [#allocation3], 128, 128, 8
    $region17: #{tpu_custom_call.1} parent=1 // pred_fallthru
      _
    // Predicated region
    $region18: #{tpu_custom_call.1} parent=1 // pred_check
      _
    $region19: #{tpu_custom_call.1} parent=1 // pred_check_branch
      %114 = sbr.rel (0) target = $region21
    $region20: #{tpu_custom_call.1} parent=1 // pred_region
      %116 = dma.done [#allocation3], 512
    $region21: #{tpu_custom_call.1} parent=1 // pred_fallthru
      _
    %117 = vsyncpa [#allocation3], 1

</llo_original>
